<compile_context>
chip_gen: v7x
topology: tpu7x:2x2x1
jax: 0.10.0
libtpu: 0.0.40
codegen_flags: <defaults>
</compile_context>

<pallas_src>
import math

import jax
import jax.numpy as jnp
from jax.experimental import pallas as pl
from jax.experimental.pallas import tpu as pltpu


_VMEM = pl.BlockSpec(memory_space=pltpu.MemorySpace.VMEM)
_SMEM = pl.BlockSpec(memory_space=pltpu.MemorySpace.SMEM)


def _masked_avg(x):
    """sum over seq axis / count of non-zeros (matches torch, incl. 0/0 -> nan)."""
    s = jnp.sum(x, axis=1)
    c = jnp.sum((x != 0).astype(jnp.float32), axis=1)
    return s / c


# ----------------------------------------------------------------------------
# Fused kernel, action=None path
# ----------------------------------------------------------------------------
def _fused_all_kernel(pre_ref, eff_ref, wpT_ref, bp_ref, we2_ref, be2_ref,
                      wt2_ref, pt_ref, et_ref):
    pre = pre_ref[...].astype(jnp.float32)                       # (B, S, Din)
    eff = eff_ref[...].astype(jnp.float32)
    p_avg = _masked_avg(pre)                                     # (B, Din)
    e_avg = _masked_avg(eff)

    # precondition projection (weights pre-transposed -> plain x @ W, MXU only)
    p_emb = jnp.dot(p_avg, wpT_ref[...],
                    preferred_element_type=jnp.float32) + bp_ref[...]   # (B, dim)
    # all-action transform: (B, dim) @ (dim, A*dim) -> lane-dense (B, A*dim)
    pt_ref[...] = jnp.dot(p_emb, wt2_ref[...],
                          preferred_element_type=jnp.float32)
    # effect projection with the (B, A, dim) broadcast folded into We2 / be2
    et_ref[...] = jnp.dot(e_avg, we2_ref[...],
                          preferred_element_type=jnp.float32) + be2_ref[...]


def _forward_all(pre, eff, WpT, bp_row, We2, be2, Wt2):
    B = pre.shape[0]
    AD = Wt2.shape[1]
    return pl.pallas_call(
        _fused_all_kernel,
        out_shape=(jax.ShapeDtypeStruct((B, AD), jnp.float32),
                   jax.ShapeDtypeStruct((B, AD), jnp.float32)),
        in_specs=[_VMEM] * 7,
        out_specs=(_VMEM, _VMEM),
    )(pre, eff, WpT, bp_row, We2, be2, Wt2)


# ----------------------------------------------------------------------------
# Fused kernel, explicit-action path (action indices live in SMEM)
# ----------------------------------------------------------------------------
def _fused_action_kernel(act_ref, pre_ref, eff_ref, wpT_ref, bp_ref, weT_ref,
                         be_ref, wtT_ref, pt_ref, ee_ref):
    pre = pre_ref[...].astype(jnp.float32)                       # (B, S, Din)
    eff = eff_ref[...].astype(jnp.float32)
    p_avg = _masked_avg(pre)
    e_avg = _masked_avg(eff)

    p_emb = jnp.dot(p_avg, wpT_ref[...],
                    preferred_element_type=jnp.float32) + bp_ref[...]   # (B, dim)
    ee_ref[...] = jnp.dot(e_avg, weT_ref[...],
                          preferred_element_type=jnp.float32) + be_ref[...]

    B = pt_ref.shape[0]                    # static, small
    for b in range(B):
        a = act_ref[b]                     # scalar read from SMEM
        w = wtT_ref[a]                     # (dim, dim): only the selected transform
        pt_ref[b:b + 1, :] = jnp.dot(p_emb[b:b + 1, :], w,
                                     preferred_element_type=jnp.float32)


def _forward_action(action, pre, eff, WpT, bp_row, WeT, be_row, WtT):
    B = pre.shape[0]
    dim = WpT.shape[1]
    return pl.pallas_call(
        _fused_action_kernel,
        out_shape=(jax.ShapeDtypeStruct((B, dim), jnp.float32),
                   jax.ShapeDtypeStruct((B, dim), jnp.float32)),
        in_specs=[_SMEM] + [_VMEM] * 7,
        out_specs=(_VMEM, _VMEM),
    )(action, pre, eff, WpT, bp_row, WeT, be_row, WtT)


# ----------------------------------------------------------------------------
# Module wrapper with deterministic parameter initialization
# ----------------------------------------------------------------------------
class TransformationNetPallas:
    def __init__(self, input_dim, dim, n_actions, key):
        self.dim = dim
        self.n_actions = n_actions
        k1, k2, k3, k4, k5 = jax.random.split(key, 5)
        lin_bound = 1.0 / math.sqrt(input_dim)          # nn.Linear default init scale
        self.Wp = jax.random.uniform(k1, (dim, input_dim), jnp.float32,
                                     -lin_bound, lin_bound)
        self.bp = jax.random.uniform(k2, (dim,), jnp.float32, -lin_bound, lin_bound)
        self.We = jax.random.uniform(k3, (dim, input_dim), jnp.float32,
                                     -lin_bound, lin_bound)
        self.be = jax.random.uniform(k4, (dim,), jnp.float32, -lin_bound, lin_bound)
        # kaiming_uniform_(a=sqrt(5)) on (n_actions, dim, dim): bound = 1/sqrt(fan_in)
        kaiming_bound = 1.0 / math.sqrt(dim * dim)
        self.Wt = jax.random.uniform(k5, (n_actions, dim, dim), jnp.float32,
                                     -kaiming_bound, kaiming_bound)

        # --- kernel-friendly pre-packed parameters (built once at init, free) ---
        self.WpT = jnp.transpose(self.Wp)                       # (Din, dim)
        self.WeT = jnp.transpose(self.We)                       # (Din, dim)
        self.bp_row = self.bp.reshape(1, dim)
        self.be_row = self.be.reshape(1, dim)
        # effect projection with the broadcast to (B, A, dim) folded in
        self.We2 = jnp.tile(self.WeT, (1, n_actions))           # (Din, A*dim)
        self.be2 = jnp.tile(self.be_row, (1, n_actions))        # (1, A*dim)
        # all-action transform packed as one matmul: Wt2[k, a*dim+d] = Wt[a, d, k]
        self.Wt2 = jnp.transpose(self.Wt, (2, 0, 1)).reshape(dim, n_actions * dim)
        # per-action transposed transform for the explicit-action path
        self.WtT = jnp.transpose(self.Wt, (0, 2, 1))            # (A, dim, dim)

    def __call__(self, precondition, effect, action=None):
        B = precondition.shape[0]
        if action is None:
            pt, et = _forward_all(precondition, effect, self.WpT, self.bp_row,
                                  self.We2, self.be2, self.Wt2)   # (B, A*dim) x2
            pt = pt.reshape(B, self.n_actions, self.dim)          # free reshape
            et = et.reshape(B, self.n_actions, self.dim)
            return pt, et
        else:
            return _forward_action(action.astype(jnp.int32), precondition, effect,
                                   self.WpT, self.bp_row, self.WeT, self.be_row,
                                   self.WtT)                      # (B, dim) x2


# ----------------------------------------------------------------------------
# Pure-JAX reference for validation
# ----------------------------------------------------------------------------
def reference_forward(net, precondition, effect, action=None):
    p_avg = precondition.sum(1) / (precondition != 0).sum(1).astype(jnp.float32)
    e_avg = effect.sum(1) / (effect != 0).sum(1).astype(jnp.float32)
    p_emb = p_avg @ net.Wp.T + net.bp
    e_emb = e_avg @ net.We.T + net.be
    B = precondition.shape[0]
    if action is None:
        pt = jnp.einsum('adk,bk->bad', net.Wt, p_emb)              # (B, A, dim)
        e_out = jnp.broadcast_to(e_emb[:, None, :], (B, net.n_actions, net.dim))
        return pt, e_out
    else:
        sel = net.Wt[action]                                       # (B, dim, dim)
        pt = jnp.einsum('bdk,bk->bd', sel, p_emb)
        return pt, e_emb


if __name__ == "__main__":
    B, S, input_dim, dim, n_actions = 2, 8, 32, 32, 4
    key = jax.random.PRNGKey(0)
    kx, ke, kp, ka = jax.random.split(key, 4)
    precondition = jax.random.normal(kx, (B, S, input_dim), jnp.float32)
    effect = jax.random.normal(ke, (B, S, input_dim), jnp.float32)
    action = jax.random.randint(ka, (B,), 0, n_actions)

    net = TransformationNetPallas(input_dim, dim, n_actions, kp)

    # action=None path
    p_t, e_e = net(precondition, effect)
    p_t, e_e = jax.block_until_ready((p_t, e_e))
    p_ref, e_ref = reference_forward(net, precondition, effect)
    assert p_t.shape == (B, n_actions, dim) and e_e.shape == (B, n_actions, dim)
    assert jnp.allclose(p_t, p_ref, atol=1e-5, rtol=1e-5)
    assert jnp.allclose(e_e, e_ref, atol=1e-5, rtol=1e-5)

    # explicit-action path
    p_t_a, e_e_a = net(precondition, effect, action)
    p_t_a, e_e_a = jax.block_until_ready((p_t_a, e_e_a))
    p_ref_a, e_ref_a = reference_forward(net, precondition, effect, action)
    assert p_t_a.shape == (B, dim) and e_e_a.shape == (B, dim)
    assert jnp.allclose(p_t_a, p_ref_a, atol=1e-5, rtol=1e-5)
    assert jnp.allclose(e_e_a, e_ref_a, atol=1e-5, rtol=1e-5)

    print("KERNEL_OK")
</pallas_src>

<mosaic_0001>
module attributes {stable_mosaic.version = 11 : i64} {
  func.func @_fused_all_kernel(%arg0: memref<2x8x32xf32, #tpu.memory_space<vmem>>, %arg1: memref<2x8x32xf32, #tpu.memory_space<vmem>>, %arg2: memref<32x32xf32, #tpu.memory_space<vmem>>, %arg3: memref<1x32xf32, #tpu.memory_space<vmem>>, %arg4: memref<32x128xf32, #tpu.memory_space<vmem>>, %arg5: memref<1x128xf32, #tpu.memory_space<vmem>>, %arg6: memref<32x128xf32, #tpu.memory_space<vmem>>, %arg7: memref<2x128xf32, #tpu.memory_space<vmem>>, %arg8: memref<2x128xf32, #tpu.memory_space<vmem>>) attributes {dimension_semantics = [], scalar_prefetch = 0 : i64, scratch_operands = 0 : i64, tpu.core_type = #tpu.core_type<tc>} {
    %c0 = arith.constant 0 : index
    %c0_0 = arith.constant 0 : index
    %c0_1 = arith.constant 0 : index
    %0 = vector.load %arg0[%c0, %c0_0, %c0_1] : memref<2x8x32xf32, #tpu.memory_space<vmem>>, vector<2x8x32xf32>
    %c0_2 = arith.constant 0 : index
    %c0_3 = arith.constant 0 : index
    %c0_4 = arith.constant 0 : index
    %1 = vector.load %arg1[%c0_2, %c0_3, %c0_4] : memref<2x8x32xf32, #tpu.memory_space<vmem>>, vector<2x8x32xf32>
    %cst = arith.constant dense<0.000000e+00> : vector<2x32xf32>
    %2 = vector.multi_reduction <add>, %0, %cst [1] : vector<2x8x32xf32> to vector<2x32xf32>
    %cst_5 = arith.constant 0.000000e+00 : f32
    %3 = vector.broadcast %cst_5 : f32 to vector<2x8x32xf32>
    %4 = arith.cmpf one, %0, %3 : vector<2x8x32xf32>
    %5 = arith.extui %4 : vector<2x8x32xi1> to vector<2x8x32xi32>
    %6 = arith.sitofp %5 : vector<2x8x32xi32> to vector<2x8x32xf32>
    %cst_6 = arith.constant dense<0.000000e+00> : vector<2x32xf32>
    %7 = vector.multi_reduction <add>, %6, %cst_6 [1] : vector<2x8x32xf32> to vector<2x32xf32>
    %8 = arith.divf %2, %7 : vector<2x32xf32>
    %cst_7 = arith.constant dense<0.000000e+00> : vector<2x32xf32>
    %9 = vector.multi_reduction <add>, %1, %cst_7 [1] : vector<2x8x32xf32> to vector<2x32xf32>
    %cst_8 = arith.constant 0.000000e+00 : f32
    %10 = vector.broadcast %cst_8 : f32 to vector<2x8x32xf32>
    %11 = arith.cmpf one, %1, %10 : vector<2x8x32xf32>
    %12 = arith.extui %11 : vector<2x8x32xi1> to vector<2x8x32xi32>
    %13 = arith.sitofp %12 : vector<2x8x32xi32> to vector<2x8x32xf32>
    %cst_9 = arith.constant dense<0.000000e+00> : vector<2x32xf32>
    %14 = vector.multi_reduction <add>, %13, %cst_9 [1] : vector<2x8x32xf32> to vector<2x32xf32>
    %15 = arith.divf %9, %14 : vector<2x32xf32>
    %c0_10 = arith.constant 0 : index
    %c0_11 = arith.constant 0 : index
    %16 = vector.load %arg2[%c0_10, %c0_11] : memref<32x32xf32, #tpu.memory_space<vmem>>, vector<32x32xf32>
    %cst_12 = arith.constant dense<0.000000e+00> : vector<2x32xf32>
    %17 = tpu.matmul %8, %16, %cst_12 {dimension_numbers = #tpu.dot_dimension_numbers<[1], [0], [0], [1], [0, 0, 1, 1], [], []>} : vector<2x32xf32>, vector<32x32xf32>, vector<2x32xf32> -> vector<2x32xf32>
    %c0_13 = arith.constant 0 : index
    %c0_14 = arith.constant 0 : index
    %18 = vector.load %arg3[%c0_13, %c0_14] : memref<1x32xf32, #tpu.memory_space<vmem>>, vector<1x32xf32>
    %19 = vector.broadcast %18 : vector<1x32xf32> to vector<2x32xf32>
    %20 = arith.addf %17, %19 : vector<2x32xf32>
    %c0_15 = arith.constant 0 : index
    %c0_16 = arith.constant 0 : index
    %21 = vector.load %arg6[%c0_15, %c0_16] : memref<32x128xf32, #tpu.memory_space<vmem>>, vector<32x128xf32>
    %cst_17 = arith.constant dense<0.000000e+00> : vector<2x128xf32>
    %22 = tpu.matmul %20, %21, %cst_17 {dimension_numbers = #tpu.dot_dimension_numbers<[1], [0], [0], [1], [0, 0, 1, 1], [], []>} : vector<2x32xf32>, vector<32x128xf32>, vector<2x128xf32> -> vector<2x128xf32>
    %c0_18 = arith.constant 0 : index
    %c0_19 = arith.constant 0 : index
    %23 = vector.load %arg7[%c0_18, %c0_19] : memref<2x128xf32, #tpu.memory_space<vmem>>, vector<2x128xf32>
    tpu.vector_store %arg7[%c0_18, %c0_19], %22 {strides = array<i32>} : memref<2x128xf32, #tpu.memory_space<vmem>>, vector<2x128xf32>,
    %c0_20 = arith.constant 0 : index
    %c0_21 = arith.constant 0 : index
    %24 = vector.load %arg4[%c0_20, %c0_21] : memref<32x128xf32, #tpu.memory_space<vmem>>, vector<32x128xf32>
    %cst_22 = arith.constant dense<0.000000e+00> : vector<2x128xf32>
    %25 = tpu.matmul %15, %24, %cst_22 {dimension_numbers = #tpu.dot_dimension_numbers<[1], [0], [0], [1], [0, 0, 1, 1], [], []>} : vector<2x32xf32>, vector<32x128xf32>, vector<2x128xf32> -> vector<2x128xf32>
    %c0_23 = arith.constant 0 : index
    %c0_24 = arith.constant 0 : index
    %26 = vector.load %arg5[%c0_23, %c0_24] : memref<1x128xf32, #tpu.memory_space<vmem>>, vector<1x128xf32>
    %27 = vector.broadcast %26 : vector<1x128xf32> to vector<2x128xf32>
    %28 = arith.addf %25, %27 : vector<2x128xf32>
    %c0_25 = arith.constant 0 : index
    %c0_26 = arith.constant 0 : index
    %29 = vector.load %arg8[%c0_25, %c0_26] : memref<2x128xf32, #tpu.memory_space<vmem>>, vector<2x128xf32>
    tpu.vector_store %arg8[%c0_25, %c0_26], %28 {strides = array<i32>} : memref<2x128xf32, #tpu.memory_space<vmem>>, vector<2x128xf32>,
    return
  }
}

</mosaic_0001>

<llo_original>
// kernel: tpu_custom_call.1
$region0: #{tpu_custom_call.1}
  #allocation0 [shape = 'u32[]', space=smem, size = 0x4, offset = 0x4, fixed_abs, tag = 'smem constant byte address 0x4 - core index']
  #allocation1 [shape = 'u32[144,128]{1,0:T(1,128)}', space=vmem, size = 0x12000, scoped, tag = 'internal scratch']
  %s0 = inlined_call_operand.hbm [shape: f32[2,8,32], index: 0, kind: input, shape index: {}]
  %s1 = inlined_call_operand.hbm [shape: f32[2,8,32], index: 1, kind: input, shape index: {}]
  %s2 = inlined_call_operand.hbm [shape: f32[32,32], index: 2, kind: input, shape index: {}]
  %s3 = inlined_call_operand.vmem [shape: f32[1,32], index: 3, kind: input, shape index: {}]
  %s4 = inlined_call_operand.hbm [shape: f32[32,128], index: 4, kind: input, shape index: {}]
  %s5 = inlined_call_operand.vmem [shape: f32[1,128], index: 5, kind: input, shape index: {}]
  %s6 = inlined_call_operand.hbm [shape: f32[32,128], index: 6, kind: input, shape index: {}]
  %s7 = inlined_call_operand.hbm [shape: f32[2,128], index: 7, kind: output, shape index: {0}]
  %s8 = inlined_call_operand.hbm [shape: f32[2,128], index: 8, kind: output, shape index: {1}]
  %9 = xla_tuple %s7, %s8
  %s10 = sld [smem:[#allocation0]]
  $region66: #{tpu_custom_call.1} parent=0
    _
  %s12 = ssub.s32 1, %s10
  %s13 = scalar_select 0, %s12, %s10
  $region1: #{tpu_custom_call.1} parent=0
    #allocation2 [shape = 'u8[8192]{0}', space=vmem, size = 0x2000, scoped, tag = 'input window, operand 0, single buffered']
    #allocation3 [shape = 's32[1]{0}', space=sflag, size = 0x4, scoped, tag = 'scoped memory for tpu_custom_call.1']
    #allocation4 [shape = 's32[1]{0}', space=sflag, size = 0x4, scoped, tag = 'scoped memory for tpu_custom_call.1']
    #allocation5 [shape = 'u8[8192]{0}', space=vmem, size = 0x2000, scoped, tag = 'input window, operand 1, single buffered']
    #allocation6 [shape = 's32[1]{0}', space=sflag, size = 0x4, scoped, tag = 'scoped memory for tpu_custom_call.1']
    #allocation7 [shape = 'u8[16384]{0}', space=vmem, size = 0x4000, scoped, tag = 'input window, operand 2, single buffered']
    #allocation8 [shape = 'u8[16384]{0}', space=vmem, size = 0x4000, scoped, tag = 'input window, operand 4, single buffered']
    #allocation9 [shape = 's32[1]{0}', space=sflag, size = 0x4, scoped, tag = 'scoped memory for tpu_custom_call.1']
    #allocation10 [shape = 'u8[16384]{0}', space=vmem, size = 0x4000, scoped, tag = 'input window, operand 6, single buffered']
    #allocation11 [shape = 'u8[1024]{0}', space=vmem, size = 0x400, scoped, tag = 'output window, operand 0, single buffered']
    #allocation12 [shape = 'u8[1024]{0}', space=vmem, size = 0x400, scoped, tag = 'output window, operand 1, single buffered']
    #allocation13 [shape = 's32[1]{0}', space=sflag, size = 0x4, scoped, tag = 'scoped memory for tpu_custom_call.1']
    %14 = vsyncpa [#allocation3], 0
    %15 = vsyncpa [#allocation6], 0
    %16 = vsyncpa [#allocation9], 0
    %17 = vsyncpa [#allocation4], 0
    %18 = vsyncpa [#allocation13], 0
    // Predicated region
    $region2: #{tpu_custom_call.1} parent=1 // pred_check
      _
    $region3: #{tpu_custom_call.1} parent=1 // pred_check_branch
      %20 = sbr.rel (0) target = $region5
    $region4: #{tpu_custom_call.1} parent=1 // pred_region
      %s22 = ssub.s32 256, 256
      %23 = vsyncadd [#allocation3], %s22
      %s24 = sshll.u32 [#allocation2], 4
      %s25 = int_to_ptr.vmem [resolvable:$true] %s24
      %30 = dma.hbm_to_vmem [thread:$0]  %s0, 256, %s25, [#allocation3], 128, 128, 8
    $region5: #{tpu_custom_call.1} parent=1 // pred_fallthru
      _
    // Predicated region
    $region6: #{tpu_custom_call.1} parent=1 // pred_check
      _
    $region7: #{tpu_custom_call.1} parent=1 // pred_check_branch
      %32 = sbr.rel (0) target = $region9
    $region8: #{tpu_custom_call.1} parent=1 // pred_region
      %s34 = ssub.s32 256, 256
      %35 = vsyncadd [#allocation6], %s34
      %s36 = sshll.u32 [#allocation5], 4
      %s37 = int_to_ptr.vmem [resolvable:$true] %s36
      %42 = dma.hbm_to_vmem [thread:$0]  %s1, 256, %s37, [#allocation6], 128, 128, 8
    $region9: #{tpu_custom_call.1} parent=1 // pred_fallthru
      _
    // Predicated region
    $region10: #{tpu_custom_call.1} parent=1 // pred_check
      _
    $region11: #{tpu_custom_call.1} parent=1 // pred_check_branch
      %44 = sbr.rel (0) target = $region13
    $region12: #{tpu_custom_call.1} parent=1 // pred_region
      %s46 = ssub.s32 512, 512
      %47 = vsyncadd [#allocation6], %s46
      %s48 = sshll.u32 [#allocation7], 4
      %s49 = int_to_ptr.vmem [resolvable:$true] %s48
      %54 = dma.hbm_to_vmem [thread:$0]  %s2, 512, %s49, [#allocation6], 128, 128, 8
    $region13: #{tpu_custom_call.1} parent=1 // pred_fallthru
      _
    // Predicated region
    $region14: #{tpu_custom_call.1} parent=1 // pred_check
      _
    $region15: #{tpu_custom_call.1} parent=1 // pred_check_branch
      %56 = sbr.rel (0) target = $region17
    $region16: #{tpu_custom_call.1} parent=1 // pred_region
      _
    $region17: #{tpu_custom_call.1} parent=1 // pred_fallthru
      _
    // Predicated region
    $region18: #{tpu_custom_call.1} parent=1 // pred_check
      _
    $region19: #{tpu_custom_call.1} parent=1 // pred_check_branch
      %58 = sbr.rel (0) target = $region21
    $region20: #{tpu_custom_call.1} parent=1 // pred_region
      %s60 = ssub.s32 512, 512
      %61 = vsyncadd [#allocation9], %s60
      %s62 = sshll.u32 [#allocation8], 4
      %s63 = int_to_ptr.vmem [resolvable:$true] %s62
      %68 = dma.hbm_to_vmem [thread:$0]  %s4, 512, %s63, [#allocation9], 128, 128, 8
    $region21: #{tpu_custom_call.1} parent=1 // pred_fallthru
      _
    // Predicated region
    $region22: #{tpu_custom_call.1} parent=1 // pred_check
      _
    $region23: #{tpu_custom_call.1} parent=1 // pred_check_branch
      %70 = sbr.rel (0) target = $region25
    $region24: #{tpu_custom_call.1} parent=1 // pred_region
      _
    $region25: #{tpu_custom_call.1} parent=1 // pred_fallthru
      _
    // Predicated region
    $region26: #{tpu_custom_call.1} parent=1 // pred_check
      _
    $region27: #{tpu_custom_call.1} parent=1 // pred_check_branch
      %72 = sbr.rel (0) target = $region29
    $region28: #{tpu_custom_call.1} parent=1 // pred_region
      %s74 = ssub.s32 512, 512
      %75 = vsyncadd [#allocation9], %s74
      %s76 = sshll.u32 [#allocation10], 4
      %s77 = int_to_ptr.vmem [resolvable:$true] %s76
      %82 = dma.hbm_to_vmem [thread:$0]  %s6, 512, %s77, [#allocation9], 128, 128, 8
    $region29: #{tpu_custom_call.1} parent=1 // pred_fallthru
      _
    // Predicated region
    $region30: #{tpu_custom_call.1} parent=1 // pred_check
      _
    $region31: #{tpu_custom_call.1} parent=1 // pred_check_branch
      %84 = sbr.rel (0) target = $region33
    $region32: #{tpu_custom_call.1} parent=1 // pred_region
      %85 = dma.done [#allocation3], 256
    $region33: #{tpu_custom_call.1} parent=1 // pred_fallthru
      _
    // Predicated region
    $region34: #{tpu_custom_call.1} parent=1 // pred_check
      _
    $region35: #{tpu_custom_call.1} parent=1 // pred_check_branch
      %87 = sbr.rel (0) target = $region37
    $region36: #{tpu_custom_call.1} parent=1 // pred_region
      %88 = dma.done [#allocation6], 256
    $region37: #{tpu_custom_call.1} parent=1 // pred_fallthru
      _
    // Predicated region
    $region38: #{tpu_custom_call.1} parent=1 // pred_check
      _
    $region39: #{tpu_custom_call.1} parent=1 // pred_check_branch
      %90 = sbr.rel (0) target = $region41
    $region40: #{tpu_custom_call.1} parent=1 // pred_region
      %91 = dma.done [#allocation6], 512
    $region41: #{tpu_custom_call.1} parent=1 // pred_fallthru
      _
    // Predicated region
    $region42: #{tpu_custom_call.1} parent=1 // pred_check
      _
    $region43: #{tpu_custom_call.1} parent=1 // pred_check_branch
      %93 = sbr.rel (0) target = $region45
    $region44: #{tpu_custom_call.1} parent=1 // pred_region
      %94 = dma.done [#allocation9], 512
    $region45: #{tpu_custom_call.1} parent=1 // pred_fallthru
      _
    // Predicated region
    $region46: #{tpu_custom_call.1} parent=1 // pred_check
      _
    $region47: #{tpu_custom_call.1} parent=1 // pred_check_branch
      %96 = sbr.rel (0) target = $region49
    $region48: #{tpu_custom_call.1} parent=1 // pred_region
      %97 = dma.done [#allocation9], 512
    $region49: #{tpu_custom_call.1} parent=1 // pred_fallthru
      _
    %v98 = vld [vmem:[#allocation2] sm:$0xff]
    %v99 = vld [vmem:[#allocation2 + $0x8] sm:$0xff]
    %v100 = vld [vmem:[#allocation5] sm:$0xff]
    %v101 = vld [vmem:[#allocation5 + $0x8] sm:$0xff]
    %vm102 = vcmask 261120
    %v103 = vsel %vm102, %v98, 0.0
    %v104 = vrot.slane %v103, 4
    %v105 = vadd.f32 %v103, %v104
    %v106 = vrot.slane %v105, 2
    %v107 = vadd.f32 %v105, %v106
    %v108 = vrot.slane %v107, 1
    %v109 = vadd.f32 %v107, %v108
    %v110 = vsel %vm102, %v99, 0.0
    %v111 = vrot.slane %v110, 4
    %v112 = vadd.f32 %v110, %v111
    %v113 = vrot.slane %v112, 2
    %v114 = vadd.f32 %v112, %v113
    %v115 = vrot.slane %v114, 1
    %v116 = vadd.f32 %v114, %v115
    %vm117 = vcmp.ne.f32.partialorder %v98, 0.0
    %vm118 = vcmp.ne.f32.partialorder %v99, 0.0
    %v119 = vsel %vm117, 1, 0
    %v120 = vsel %vm118, 1, 0
    %v121 = vcvt.s32.f32 %v119
    %v122 = vcvt.s32.f32 %v120
    %v123 = vsel %vm102, %v121, 0.0
    %v124 = vrot.slane %v123, 4
    %v125 = vadd.f32 %v123, %v124
    %v126 = vrot.slane %v125, 2
    %v127 = vadd.f32 %v125, %v126
    %v128 = vrot.slane %v127, 1
    %v129 = vadd.f32 %v127, %v128
    %v130 = vsel %vm102, %v122, 0.0
    %v131 = vrot.slane %v130, 4
    %v132 = vadd.f32 %v130, %v131
    %v133 = vrot.slane %v132, 2
    %v134 = vadd.f32 %v132, %v133
    %v135 = vrot.slane %v134, 1
    %v136 = vadd.f32 %v134, %v135
    %v137 = vrcp.pop %v129
    %v138 = vmul.f32 %v109, %v137
    %v139 = vrcp.pop %v136
    %v140 = vmul.f32 %v116, %v139
    %v141 = vsel %vm102, %v100, 0.0
    %v142 = vrot.slane %v141, 4
    %v143 = vadd.f32 %v141, %v142
    %v144 = vrot.slane %v143, 2
    %v145 = vadd.f32 %v143, %v144
    %v146 = vrot.slane %v145, 1
    %v147 = vadd.f32 %v145, %v146
    %v148 = vsel %vm102, %v101, 0.0
    %v149 = vrot.slane %v148, 4
    %v150 = vadd.f32 %v148, %v149
    %v151 = vrot.slane %v150, 2
    %v152 = vadd.f32 %v150, %v151
    %v153 = vrot.slane %v152, 1
    %v154 = vadd.f32 %v152, %v153
    %vm155 = vcmp.ne.f32.partialorder %v100, 0.0
    %vm156 = vcmp.ne.f32.partialorder %v101, 0.0
    %v157 = vsel %vm155, 1, 0
    %v158 = vsel %vm156, 1, 0
    %v159 = vcvt.s32.f32 %v157
    %v160 = vcvt.s32.f32 %v158
    %v161 = vsel %vm102, %v159, 0.0
    %v162 = vrot.slane %v161, 4
    %v163 = vadd.f32 %v161, %v162
    %v164 = vrot.slane %v163, 2
    %v165 = vadd.f32 %v163, %v164
    %v166 = vrot.slane %v165, 1
    %v167 = vadd.f32 %v165, %v166
    %v168 = vsel %vm102, %v160, 0.0
    %v169 = vrot.slane %v168, 4
    %v170 = vadd.f32 %v168, %v169
    %v171 = vrot.slane %v170, 2
    %v172 = vadd.f32 %v170, %v171
    %v173 = vrot.slane %v172, 1
    %v174 = vadd.f32 %v172, %v173
    %v175 = vrcp.pop %v167
    %v176 = vmul.f32 %v147, %v175
    %v177 = vrcp.pop %v174
    %v178 = vmul.f32 %v154, %v177
    %v179 = vld [vmem:[#allocation7] sm:$0xff]
    %v180 = vld [vmem:[#allocation7 + $0x8] sm:$0xff]
    %v181 = vld [vmem:[#allocation7 + $0x10] sm:$0xff]
    %v182 = vld [vmem:[#allocation7 + $0x18] sm:$0xff]
    %v183 = vld [vmem:[%s3] sm:$0x1]
    %v185 = vlaneseq
    %v186 = vshrl.u32 %v185, 7
    %v187 = vsub.s32 0, %v186
    %v188 = vrot.slane %v183, %v187
    %vm192 = vcmask 1041409
    %v193 = vsel %vm192, %v140, %v138
    %v194 = vsel %vm102, %v193, 0
    %196 = vmatprep.subr.mxu0 0.0
    %197 = vmatpush1.msra.mxu0 %v179
    %198 = vmatprep.subr.mxu0 0.0
    %199 = vmatpush1.msra.mxu0 %v180
    %200 = vmatprep.subr.mxu0 0.0
    %201 = vmatpush1.msra.mxu0 %v181
    %202 = vmatprep.subr.mxu0 0.0
    %203 = vmatpush1.msra.mxu0 %v182
    %204 = vmatprep.subr.mxu0 0.0
    %205 = vmatpush1.msra.mxu0 0.0
    %206 = vmatprep.subr.mxu0 0.0
    %207 = vmatpush1.msra.mxu0 0.0
    %208 = vmatprep.subr.mxu0 0.0
    %209 = vmatpush1.msra.mxu0 0.0
    %210 = vmatprep.subr.mxu0 0.0
    %211 = vmatpush1.msra.mxu0 0.0
    %212 = vmatprep.subr.mxu0 0.0
    %213 = vmatpush1.msra.mxu0 0.0
    %214 = vmatprep.subr.mxu0 0.0
    %215 = vmatpush1.msra.mxu0 0.0
    %216 = vmatprep.subr.mxu0 0.0
    %217 = vmatpush1.msra.mxu0 0.0
    %218 = vmatprep.subr.mxu0 0.0
    %219 = vmatpush1.msra.mxu0 0.0
    %220 = vmatprep.subr.mxu0 0.0
    %221 = vmatpush1.msra.mxu0 0.0
    %222 = vmatprep.subr.mxu0 0.0
    %223 = vmatpush1.msra.mxu0 0.0
    %224 = vmatprep.subr.mxu0 0.0
    %225 = vmatpush1.msra.mxu0 0.0
    %226 = vmatprep.subr.mxu0 0.0
    %227 = vmatpush1.msra.mxu0 0.0
    %228 = vmatprep.subr.mxu0 0.0
    %229 = vmatpush1.msra.mxu0 0.0
    %230 = vmatprep.subr.mxu0 0.0
    %231 = vmatpush1.msra.mxu0 0.0
    %232 = vmatprep.subr.mxu0 0.0
    %233 = vmatpush1.msra.mxu0 0.0
    %234 = vmatprep.subr.mxu0 0.0
    %235 = vmatpush1.msra.mxu0 0.0
    %236 = vmatprep.subr.mxu0 0.0
    %237 = vmatpush1.msra.mxu0 0.0
    %238 = vmatprep.subr.mxu0 0.0
    %239 = vmatpush1.msra.mxu0 0.0
    %240 = vmatprep.subr.mxu0 0.0
    %241 = vmatpush1.msra.mxu0 0.0
    %242 = vmatprep.subr.mxu0 0.0
    %243 = vmatpush1.msra.mxu0 0.0
    %244 = vmatprep.subr.mxu0 0.0
    %245 = vmatpush1.msra.mxu0 0.0
    %246 = vmatprep.subr.mxu0 0.0
    %247 = vmatpush1.msra.mxu0 0.0
    %248 = vmatprep.subr.mxu0 0.0
    %249 = vmatpush1.msra.mxu0 0.0
    %250 = vmatprep.subr.mxu0 0.0
    %251 = vmatpush1.msra.mxu0 0.0
    %252 = vmatprep.subr.mxu0 0.0
    %253 = vmatpush1.msra.mxu0 0.0
    %254 = vmatprep.subr.mxu0 0.0
    %255 = vmatpush1.msra.mxu0 0.0
    %256 = vmatprep.subr.mxu0 0.0
    %257 = vmatpush1.msra.mxu0 0.0
    %258 = vmatprep.subr.mxu0 0.0
    %259 = vmatpush1.msra.mxu0 0.0
    %260 = vmatprep.mubr.f32.mxu0 0.0
    %261 = vmatmul.mubr.f32.gmra.mrb[0].mxu0 %v194
    %v262 = vpop.f32.mrb[0].mxu0
    %v263 = vadd.f32 %v188, %v262
    %v264 = vpop.f32.mrb[0].mxu0
    %265 = vdwg.mxu0
    %v266 = vld [vmem:[#allocation10] sm:$0xff]
    %v267 = vld [vmem:[#allocation10 + $0x8] sm:$0xff]
    %v268 = vld [vmem:[#allocation10 + $0x10] sm:$0xff]
    %v269 = vld [vmem:[#allocation10 + $0x18] sm:$0xff]
    %v271 = vsel %vm102, %v263, 0
    %273 = vmatprep.subr.mxu0 0.0
    %274 = vmatpush1.msra.mxu0 %v266
    %275 = vmatprep.subr.mxu0 0.0
    %276 = vmatpush1.msra.mxu0 %v267
    %277 = vmatprep.subr.mxu0 0.0
    %278 = vmatpush1.msra.mxu0 %v268
    %279 = vmatprep.subr.mxu0 0.0
    %280 = vmatpush1.msra.mxu0 %v269
    %281 = vmatprep.subr.mxu0 0.0
    %282 = vmatpush1.msra.mxu0 0.0
    %283 = vmatprep.subr.mxu0 0.0
    %284 = vmatpush1.msra.mxu0 0.0
    %285 = vmatprep.subr.mxu0 0.0
    %286 = vmatpush1.msra.mxu0 0.0
    %287 = vmatprep.subr.mxu0 0.0
    %288 = vmatpush1.msra.mxu0 0.0
    %289 = vmatprep.subr.mxu0 0.0
    %290 = vmatpush1.msra.mxu0 0.0
    %291 = vmatprep.subr.mxu0 0.0
    %292 = vmatpush1.msra.mxu0 0.0
    %293 = vmatprep.subr.mxu0 0.0
    %294 = vmatpush1.msra.mxu0 0.0
    %295 = vmatprep.subr.mxu0 0.0
    %296 = vmatpush1.msra.mxu0 0.0
    %297 = vmatprep.subr.mxu0 0.0
    %298 = vmatpush1.msra.mxu0 0.0
    %299 = vmatprep.subr.mxu0 0.0
    %300 = vmatpush1.msra.mxu0 0.0
    %301 = vmatprep.subr.mxu0 0.0
    %302 = vmatpush1.msra.mxu0 0.0
    %303 = vmatprep.subr.mxu0 0.0
    %304 = vmatpush1.msra.mxu0 0.0
    %305 = vmatprep.subr.mxu0 0.0
    %306 = vmatpush1.msra.mxu0 0.0
    %307 = vmatprep.subr.mxu0 0.0
    %308 = vmatpush1.msra.mxu0 0.0
    %309 = vmatprep.subr.mxu0 0.0
    %310 = vmatpush1.msra.mxu0 0.0
    %311 = vmatprep.subr.mxu0 0.0
    %312 = vmatpush1.msra.mxu0 0.0
    %313 = vmatprep.subr.mxu0 0.0
    %314 = vmatpush1.msra.mxu0 0.0
    %315 = vmatprep.subr.mxu0 0.0
    %316 = vmatpush1.msra.mxu0 0.0
    %317 = vmatprep.subr.mxu0 0.0
    %318 = vmatpush1.msra.mxu0 0.0
    %319 = vmatprep.subr.mxu0 0.0
    %320 = vmatpush1.msra.mxu0 0.0
    %321 = vmatprep.subr.mxu0 0.0
    %322 = vmatpush1.msra.mxu0 0.0
    %323 = vmatprep.subr.mxu0 0.0
    %324 = vmatpush1.msra.mxu0 0.0
    %325 = vmatprep.subr.mxu0 0.0
    %326 = vmatpush1.msra.mxu0 0.0
    %327 = vmatprep.subr.mxu0 0.0
    %328 = vmatpush1.msra.mxu0 0.0
    %329 = vmatprep.subr.mxu0 0.0
    %330 = vmatpush1.msra.mxu0 0.0
    %331 = vmatprep.subr.mxu0 0.0
    %332 = vmatpush1.msra.mxu0 0.0
    %333 = vmatprep.subr.mxu0 0.0
    %334 = vmatpush1.msra.mxu0 0.0
    %335 = vmatprep.subr.mxu0 0.0
    %336 = vmatpush1.msra.mxu0 0.0
    %337 = vmatprep.mubr.f32.mxu0 0.0
    %338 = vmatmul.mubr.f32.gmra.mrb[0].mxu0 %v271
    %v339 = vpop.f32.mrb[0].mxu0
    %v340 = vadd.f32 0.0, %v339
    %v341 = vpop.f32.mrb[0].mxu0
    %342 = vdwg.mxu0
    %343 = vst [vmem:[#allocation11] sm:$0x3] %v340
    %v344 = vld [vmem:[#allocation8] sm:$0xff]
    %v345 = vld [vmem:[#allocation8 + $0x8] sm:$0xff]
    %v346 = vld [vmem:[#allocation8 + $0x10] sm:$0xff]
    %v347 = vld [vmem:[#allocation8 + $0x18] sm:$0xff]
    %v348 = vld [vmem:[%s5] sm:$0x1]
    %v350 = vlaneseq
    %v351 = vshrl.u32 %v350, 7
    %v352 = vsub.s32 0, %v351
    %v353 = vrot.slane %v348, %v352
    %v357 = vsel %vm192, %v178, %v176
    %v358 = vsel %vm102, %v357, 0
    %360 = vmatprep.subr.mxu0 0.0
    %361 = vmatpush1.msra.mxu0 %v344
    %362 = vmatprep.subr.mxu0 0.0
    %363 = vmatpush1.msra.mxu0 %v345
    %364 = vmatprep.subr.mxu0 0.0
    %365 = vmatpush1.msra.mxu0 %v346
    %366 = vmatprep.subr.mxu0 0.0
    %367 = vmatpush1.msra.mxu0 %v347
    %368 = vmatprep.subr.mxu0 0.0
    %369 = vmatpush1.msra.mxu0 0.0
    %370 = vmatprep.subr.mxu0 0.0
    %371 = vmatpush1.msra.mxu0 0.0
    %372 = vmatprep.subr.mxu0 0.0
    %373 = vmatpush1.msra.mxu0 0.0
    %374 = vmatprep.subr.mxu0 0.0
    %375 = vmatpush1.msra.mxu0 0.0
    %376 = vmatprep.subr.mxu0 0.0
    %377 = vmatpush1.msra.mxu0 0.0
    %378 = vmatprep.subr.mxu0 0.0
    %379 = vmatpush1.msra.mxu0 0.0
    %380 = vmatprep.subr.mxu0 0.0
    %381 = vmatpush1.msra.mxu0 0.0
    %382 = vmatprep.subr.mxu0 0.0
    %383 = vmatpush1.msra.mxu0 0.0
    %384 = vmatprep.subr.mxu0 0.0
    %385 = vmatpush1.msra.mxu0 0.0
    %386 = vmatprep.subr.mxu0 0.0
    %387 = vmatpush1.msra.mxu0 0.0
    %388 = vmatprep.subr.mxu0 0.0
    %389 = vmatpush1.msra.mxu0 0.0
    %390 = vmatprep.subr.mxu0 0.0
    %391 = vmatpush1.msra.mxu0 0.0
    %392 = vmatprep.subr.mxu0 0.0
    %393 = vmatpush1.msra.mxu0 0.0
    %394 = vmatprep.subr.mxu0 0.0
    %395 = vmatpush1.msra.mxu0 0.0
    %396 = vmatprep.subr.mxu0 0.0
    %397 = vmatpush1.msra.mxu0 0.0
    %398 = vmatprep.subr.mxu0 0.0
    %399 = vmatpush1.msra.mxu0 0.0
    %400 = vmatprep.subr.mxu0 0.0
    %401 = vmatpush1.msra.mxu0 0.0
    %402 = vmatprep.subr.mxu0 0.0
    %403 = vmatpush1.msra.mxu0 0.0
    %404 = vmatprep.subr.mxu0 0.0
    %405 = vmatpush1.msra.mxu0 0.0
    %406 = vmatprep.subr.mxu0 0.0
    %407 = vmatpush1.msra.mxu0 0.0
    %408 = vmatprep.subr.mxu0 0.0
    %409 = vmatpush1.msra.mxu0 0.0
    %410 = vmatprep.subr.mxu0 0.0
    %411 = vmatpush1.msra.mxu0 0.0
    %412 = vmatprep.subr.mxu0 0.0
    %413 = vmatpush1.msra.mxu0 0.0
    %414 = vmatprep.subr.mxu0 0.0
    %415 = vmatpush1.msra.mxu0 0.0
    %416 = vmatprep.subr.mxu0 0.0
    %417 = vmatpush1.msra.mxu0 0.0
    %418 = vmatprep.subr.mxu0 0.0
    %419 = vmatpush1.msra.mxu0 0.0
    %420 = vmatprep.subr.mxu0 0.0
    %421 = vmatpush1.msra.mxu0 0.0
    %422 = vmatprep.subr.mxu0 0.0
    %423 = vmatpush1.msra.mxu0 0.0
    %424 = vmatprep.mubr.f32.mxu0 0.0
    %425 = vmatmul.mubr.f32.gmra.mrb[0].mxu0 %v358
    %v426 = vpop.f32.mrb[0].mxu0
    %v427 = vadd.f32 %v353, %v426
    %v428 = vpop.f32.mrb[0].mxu0
    %429 = vdwg.mxu0
    %430 = vst [vmem:[#allocation12] sm:$0x3] %v427
    // Predicated region
    $region50: #{tpu_custom_call.1} parent=1 // pred_check
      _
    $region51: #{tpu_custom_call.1} parent=1 // pred_check_branch
      %432 = sbr.rel (0) target = $region53
    $region52: #{tpu_custom_call.1} parent=1 // pred_region
      %s434 = ssub.s32 32, 32
      %435 = vsyncadd [#allocation4], %s434
      %s437 = sshll.u32 [#allocation11], 4
      %s438 = int_to_ptr.vmem [resolvable:$true] %s437
      %440 = dma.vmem_to_hbm [thread:$0]  %s438, 32, %s7, [#allocation4]
    $region53: #{tpu_custom_call.1} parent=1 // pred_fallthru
      _
    // Predicated region
    $region54: #{tpu_custom_call.1} parent=1 // pred_check
      _
    $region55: #{tpu_custom_call.1} parent=1 // pred_check_branch
      %442 = sbr.rel (0) target = $region57
    $region56: #{tpu_custom_call.1} parent=1 // pred_region
      %s444 = ssub.s32 32, 32
      %445 = vsyncadd [#allocation13], %s444
      %s447 = sshll.u32 [#allocation12], 4
      %s448 = int_to_ptr.vmem [resolvable:$true] %s447
      %450 = dma.vmem_to_hbm [thread:$0]  %s448, 32, %s8, [#allocation13]
    $region57: #{tpu_custom_call.1} parent=1 // pred_fallthru
      _
    // Predicated region
    $region58: #{tpu_custom_call.1} parent=1 // pred_check
      _
    $region59: #{tpu_custom_call.1} parent=1 // pred_check_branch
      %452 = sbr.rel (0) target = $region61
    $region60: #{tpu_custom_call.1} parent=1 // pred_region
      %453 = dma.done [#allocation4], 32
    $region61: #{tpu_custom_call.1} parent=1 // pred_fallthru
      _
    // Predicated region
    $region62: #{tpu_custom_call.1} parent=1 // pred_check
      _
    $region63: #{tpu_custom_call.1} parent=1 // pred_check_branch
      %455 = sbr.rel (0) target = $region65
    $region64: #{tpu_custom_call.1} parent=1 // pred_region
      %456 = dma.done [#allocation13], 32
    $region65: #{tpu_custom_call.1} parent=1 // pred_fallthru
      _
    %457 = vsyncpa [#allocation3], 1
    %458 = vsyncpa [#allocation6], 1
    %459 = vsyncpa [#allocation9], 1
    %460 = vsyncpa [#allocation4], 1
    %461 = vsyncpa [#allocation13], 1

</llo_original>
